<compile_context>
chip_gen: v7x
topology: tpu7x:2x2x1
jax: 0.10.0
libtpu: 0.0.40
codegen_flags: <defaults>
</compile_context>

<pallas_src>
import functools

import jax
import jax.numpy as jnp
from jax import lax
from jax.experimental import pallas as pl
from jax.experimental.pallas import tpu as pltpu


# ----------------------------------------------------------------------------
# Pallas kernels
# ----------------------------------------------------------------------------
def _mm_kernel(a_ref, w_ref, b_ref, o_ref, *, relu):
    """o += A @ W over the K grid axis; epilogue (last k): + bias (+ReLU)."""
    k = pl.program_id(2)

    @pl.when(k == 0)
    def _():
        o_ref[...] = jnp.zeros_like(o_ref)

    o_ref[...] += jnp.dot(a_ref[...], w_ref[...],
                          preferred_element_type=jnp.float32)

    @pl.when(k == pl.num_programs(2) - 1)
    def _():
        y = o_ref[...] + b_ref[...]
        if relu:
            y = jnp.maximum(y, 0.0)
        o_ref[...] = y


def _mm_res_kernel(a_ref, w_ref, b_ref, r_ref, o_ref, *, relu):
    """Same as _mm_kernel but with a fused residual add in the epilogue."""
    k = pl.program_id(2)

    @pl.when(k == 0)
    def _():
        o_ref[...] = jnp.zeros_like(o_ref)

    o_ref[...] += jnp.dot(a_ref[...], w_ref[...],
                          preferred_element_type=jnp.float32)

    @pl.when(k == pl.num_programs(2) - 1)
    def _():
        y = o_ref[...] + b_ref[...] + r_ref[...]
        if relu:
            y = jnp.maximum(y, 0.0)
        o_ref[...] = y


def _max9_kernel(*refs):
    # 9 tap refs (tm, C) + output ref (tm, C): elementwise max over taps.
    *taps, o_ref = refs
    m = taps[0][...]
    for t in taps[1:]:
        m = jnp.maximum(m, t[...])
    o_ref[...] = m


def _avgpool_kernel(x_ref, o_ref):
    # x: (N, H*W, C) -> mean over spatial axis (AdaptiveAvgPool2d((1,1))).
    o_ref[...] = jnp.mean(x_ref[...], axis=1)


# ----------------------------------------------------------------------------
# Tiling helpers
# ----------------------------------------------------------------------------
def _round_up(x, m):
    return (x + m - 1) // m * m


def _choose_k_tiling(K):
    """Pad K to a lane-aligned Kp and pick a reduction tile tk dividing Kp."""
    Kp = _round_up(K, 128)
    if Kp <= 512:
        return Kp, Kp
    for tk in (512, 384, 256, 128):
        if Kp % tk == 0:
            return Kp, tk
    Kp = _round_up(Kp, 512)
    return Kp, 512


def _choose_mn_tiling(M, Np):
    """M tile (multiple of 16 for bf16 sublane packing) and N tile (>=128)."""
    if M >= 256:
        tm = 256
    else:
        tm = _round_up(max(M, 16), 16)
    Mp = _round_up(M, tm)
    tn = 256 if Np % 256 == 0 else 128
    return Mp, tm, tn


# ----------------------------------------------------------------------------
# Pallas wrappers
# ----------------------------------------------------------------------------
def fused_matmul(a, mp, relu, residual=None):
    """relu?( (a @ W_folded) + bias (+ residual) ).

    a: (M, K) f32 activations (cast to bf16 here).
    mp: prepared matmul params (pre-padded bf16 weight + f32 bias row).
    residual: optional (M, cout) f32.
    """
    M, K = a.shape
    Kp, tk, Np, cout = mp["Kp"], mp["tk"], mp["Np"], mp["cout"]
    Mp, tm, tn = _choose_mn_tiling(M, Np)

    a_p = jnp.pad(a, ((0, Mp - M), (0, Kp - K))).astype(jnp.bfloat16)

    in_specs = [
        pl.BlockSpec((tm, tk), lambda i, j, k: (i, k)),
        pl.BlockSpec((tk, tn), lambda i, j, k: (k, j)),
        pl.BlockSpec((1, tn), lambda i, j, k: (0, j)),
    ]
    args = [a_p, mp["wmat"], mp["bias"]]

    if residual is not None:
        r_p = jnp.pad(residual,
                      ((0, Mp - M), (0, Np - cout))).astype(jnp.float32)
        in_specs.append(pl.BlockSpec((tm, tn), lambda i, j, k: (i, j)))
        args.append(r_p)
        kern = functools.partial(_mm_res_kernel, relu=relu)
        res_bytes = Mp * Np * 4
    else:
        kern = functools.partial(_mm_kernel, relu=relu)
        res_bytes = 0

    cost = pl.CostEstimate(
        flops=2 * Mp * Np * Kp,
        transcendentals=0,
        bytes_accessed=Mp * Kp * 2 + Kp * Np * 2 + Mp * Np * 4 + res_bytes,
    )

    out = pl.pallas_call(
        kern,
        out_shape=jax.ShapeDtypeStruct((Mp, Np), jnp.float32),
        grid_spec=pltpu.PrefetchScalarGridSpec(
            num_scalar_prefetch=0,
            grid=(Mp // tm, Np // tn, Kp // tk),
            in_specs=in_specs,
            out_specs=pl.BlockSpec((tm, tn), lambda i, j, k: (i, j)),
        ),
        compiler_params=pltpu.CompilerParams(
            dimension_semantics=("parallel", "parallel", "arbitrary")),
        cost_estimate=cost,
    )(*args)
    return out[:M, :cout]


def conv_bn(x, cp, stride, pad, relu, residual=None):
    """Conv2d(bias=False) + folded BatchNorm (+optional residual, +optional ReLU).

    x: (N, H, W, Cin) f32; cp: prepared conv params (BN folded into weights).
    """
    N, H, W, Cin = x.shape
    KH, KW, cout = cp["kh"], cp["kw"], cp["cout"]
    OH = (H + 2 * pad - KH) // stride + 1
    OW = (W + 2 * pad - KW) // stride + 1

    if KH == 1 and KW == 1 and pad == 0:
        a = x[:, ::stride, ::stride, :].reshape(N * OH * OW, Cin)
    else:
        xp = jnp.pad(x, ((0, 0), (pad, pad), (pad, pad), (0, 0)))
        cols = []
        for dy in range(KH):
            for dx in range(KW):
                cols.append(lax.slice(
                    xp,
                    (0, dy, dx, 0),
                    (N, dy + stride * (OH - 1) + 1,
                     dx + stride * (OW - 1) + 1, Cin),
                    (1, stride, stride, 1)))
        a = jnp.concatenate(cols, axis=-1).reshape(N * OH * OW, KH * KW * Cin)

    r = None if residual is None else residual.reshape(N * OH * OW, cout)
    out = fused_matmul(a, cp, relu, residual=r)
    return out.reshape(N, OH, OW, cout)


def maxpool_3x3_s2_p1(x):
    """nn.MaxPool2d(kernel_size=3, stride=2, padding=1) on NHWC input."""
    N, H, W, C = x.shape
    k, s, pad = 3, 2, 1
    xp = jnp.pad(x, ((0, 0), (pad, pad), (pad, pad), (0, 0)),
                 constant_values=-jnp.inf)
    OH = (H + 2 * pad - k) // s + 1
    OW = (W + 2 * pad - k) // s + 1
    M = N * OH * OW
    tm = min(1024, _round_up(M, 8))
    Mp = _round_up(M, tm)

    taps = []
    for dy in range(k):
        for dx in range(k):
            t = lax.slice(
                xp,
                (0, dy, dx, 0),
                (N, dy + s * (OH - 1) + 1, dx + s * (OW - 1) + 1, C),
                (1, s, s, 1)).reshape(M, C)
            taps.append(jnp.pad(t, ((0, Mp - M), (0, 0))))

    out = pl.pallas_call(
        _max9_kernel,
        out_shape=jax.ShapeDtypeStruct((Mp, C), jnp.float32),
        grid_spec=pltpu.PrefetchScalarGridSpec(
            num_scalar_prefetch=0,
            grid=(Mp // tm,),
            in_specs=[pl.BlockSpec((tm, C), lambda i: (i, 0))
                      for _ in range(k * k)],
            out_specs=pl.BlockSpec((tm, C), lambda i: (i, 0)),
        ),
        compiler_params=pltpu.CompilerParams(
            dimension_semantics=("parallel",)),
    )(*taps)
    return out[:M].reshape(N, OH, OW, C)


def adaptive_avg_pool_11(x):
    """nn.AdaptiveAvgPool2d((1,1)) + flatten on NHWC input -> (N, C)."""
    N, H, W, C = x.shape
    xr = x.reshape(N, H * W, C)
    out = pl.pallas_call(
        _avgpool_kernel,
        out_shape=jax.ShapeDtypeStruct((N, C), jnp.float32),
        in_specs=[pl.BlockSpec((N, H * W, C), lambda: (0, 0, 0))],
        out_specs=pl.BlockSpec((N, C), lambda: (0, 0)),
    )(xr)
    return out


# ----------------------------------------------------------------------------
# Parameter construction (deterministic, synthetic; weights pre-padded/folded)
# ----------------------------------------------------------------------------
class _Keys:
    def __init__(self, key):
        self._key = key

    def next(self):
        self._key, k = jax.random.split(self._key)
        return k


def _make_bn(kg, c, eps=1e-5):
    gamma = 1.0 + 0.1 * jax.random.normal(kg.next(), (c,))
    beta = 0.1 * jax.random.normal(kg.next(), (c,))
    rmean = 0.1 * jax.random.normal(kg.next(), (c,))
    rvar = 1.0 + 0.1 * jax.random.uniform(kg.next(), (c,))
    scale = gamma / jnp.sqrt(rvar + eps)
    bias = beta - rmean * scale
    return scale.astype(jnp.float32), bias.astype(jnp.float32)


def _prep_matmul(wmat_f32, bias, *, kh, kw, cin, cout):
    """Pad + cast a (K, cout) weight matrix once at init (BN scale pre-folded)."""
    K = wmat_f32.shape[0]
    Kp, tk = _choose_k_tiling(K)
    Np = _round_up(cout, 128)
    wmat = jnp.pad(wmat_f32, ((0, Kp - K), (0, Np - cout))).astype(jnp.bfloat16)
    brow = jnp.pad(bias, (0, Np - cout)).reshape(1, Np).astype(jnp.float32)
    return {"wmat": wmat, "bias": brow, "kh": kh, "kw": kw, "cin": cin,
            "cout": cout, "K": K, "Kp": Kp, "tk": tk, "Np": Np}


def _prep_conv(kg, kh, kw, cin, cout):
    w = (0.05 * jax.random.normal(kg.next(), (kh, kw, cin, cout))).astype(jnp.float32)
    scale, bias = _make_bn(kg, cout)
    wmat = w.reshape(kh * kw * cin, cout) * scale[None, :]   # fold BN scale
    return _prep_matmul(wmat, bias, kh=kh, kw=kw, cin=cin, cout=cout)


def _prep_fc(kg, cin, cout):
    w = (0.05 * jax.random.normal(kg.next(), (cin, cout))).astype(jnp.float32)
    b = (0.05 * jax.random.normal(kg.next(), (cout,))).astype(jnp.float32)
    return _prep_matmul(w, b, kh=1, kw=1, cin=cin, cout=cout)


EXPANSION = 1  # BasicBlock


def init_params(key, in_chans, num_block, num_classes):
    kg = _Keys(key)
    params = {}
    params["conv1"] = _prep_conv(kg, 7, 7, in_chans, 64)

    in_channels = 64
    layers = []
    for out_c, nb, stride0 in zip([64, 128, 256, 512], num_block, [1, 2, 2, 2]):
        blocks = []
        strides = [stride0] + [1] * (nb - 1)
        for stride in strides:
            blk = {"stride": stride}
            blk["c1"] = _prep_conv(kg, 3, 3, in_channels, out_c)
            blk["c2"] = _prep_conv(kg, 3, 3, out_c, out_c * EXPANSION)
            blk["has_shortcut"] = (stride != 1) or (in_channels != out_c * EXPANSION)
            if blk["has_shortcut"]:
                blk["cs"] = _prep_conv(kg, 1, 1, in_channels, out_c * EXPANSION)
            blocks.append(blk)
            in_channels = out_c * EXPANSION
        layers.append(blocks)
    params["layers"] = layers

    params["fc"] = _prep_fc(kg, 512 * EXPANSION, num_classes)
    return params


# ----------------------------------------------------------------------------
# Forward pass
# ----------------------------------------------------------------------------
def basic_block(x, blk):
    """relu( BN(conv3x3( relu(BN(conv3x3(x))) )) + shortcut(x) ) — fused in kernels."""
    stride = blk["stride"]
    y = conv_bn(x, blk["c1"], stride, 1, relu=True)
    if blk["has_shortcut"]:
        sc = conv_bn(x, blk["cs"], stride, 0, relu=False)
    else:
        sc = x
    # second conv: fused BN + residual add + final ReLU in the matmul epilogue
    y = conv_bn(y, blk["c2"], 1, 1, relu=True, residual=sc)
    return y


def resnet_forward(x_nchw, params):
    x = jnp.transpose(x_nchw, (0, 2, 3, 1)).astype(jnp.float32)  # NCHW -> NHWC

    f1 = conv_bn(x, params["conv1"], stride=2, pad=3, relu=True)
    y = maxpool_3x3_s2_p1(f1)

    feats = []
    for layer in params["layers"]:
        for blk in layer:
            y = basic_block(y, blk)
        feats.append(y)
    f2, f3, f4, f5 = feats

    pooled = adaptive_avg_pool_11(f5)                      # (N, 512)
    logits = fused_matmul(pooled, params["fc"], relu=False)

    to_nchw = lambda t: jnp.transpose(t, (0, 3, 1, 2))
    return (to_nchw(f1), to_nchw(f2), to_nchw(f3), to_nchw(f4), to_nchw(f5), logits)


# ----------------------------------------------------------------------------
if __name__ == "__main__":
    key = jax.random.PRNGKey(0)
    kp, kx = jax.random.split(key)

    in_chans = 4
    num_block = [1, 1, 1, 1]      # one BasicBlock per stage (small synthetic ResNet)
    num_classes = 10

    params = init_params(kp, in_chans, num_block, num_classes)
    x = jax.random.normal(kx, (2, in_chans, 16, 16), jnp.float32)  # NCHW like PyTorch

    outs = resnet_forward(x, params)
    jax.block_until_ready(outs)

    # sanity on shapes (NCHW, matching the PyTorch module)
    f1, f2, f3, f4, f5, logits = outs
    assert f1.shape == (2, 64, 8, 8)
    assert f2.shape == (2, 64, 4, 4)
    assert f3.shape == (2, 128, 2, 2)
    assert f4.shape == (2, 256, 1, 1)
    assert f5.shape == (2, 512, 1, 1)
    assert logits.shape == (2, num_classes)

    print("KERNEL_OK")
</pallas_src>

<mosaic_0001>
module attributes {stable_mosaic.version = 11 : i64} {
  func.func @_mm_kernel(%arg0: i32, %arg1: i32, %arg2: i32, %arg3: memref<128x256xbf16, #tpu.memory_space<vmem>>, %arg4: memref<256x128xbf16, #tpu.memory_space<vmem>>, %arg5: memref<1x128xf32, #tpu.memory_space<vmem>>, %arg6: memref<128x128xf32, #tpu.memory_space<vmem>>) attributes {dimension_semantics = [#tpu.dimension_semantics<parallel>, #tpu.dimension_semantics<parallel>, #tpu.dimension_semantics<arbitrary>], iteration_bounds = array<i64: 1, 1, 1>, scalar_prefetch = 0 : i64, scratch_operands = 0 : i64, tpu.core_type = #tpu.core_type<tc>, window_params = [{transform_indices = @transform_0, window_bounds = array<i64: 128, 256>}, {transform_indices = @transform_1, window_bounds = array<i64: 256, 128>}, {transform_indices = @transform_2, window_bounds = array<i64: 1, 128>}, {transform_indices = @transform_3, window_bounds = array<i64: 128, 128>}]} {
    %c0_i32 = arith.constant 0 : i32
    %0 = arith.cmpi eq, %arg2, %c0_i32 : i32
    %1 = arith.extui %0 : i1 to i32
    %c0_i32_0 = arith.constant 0 : i32
    %2 = arith.cmpi ne, %1, %c0_i32_0 : i32
    scf.if %2 {
      %cst_10 = arith.constant 0.000000e+00 : f32
      %12 = vector.broadcast %cst_10 : f32 to vector<128x128xf32>
      %c0_11 = arith.constant 0 : index
      %c0_12 = arith.constant 0 : index
      %13 = vector.load %arg6[%c0_11, %c0_12] : memref<128x128xf32, #tpu.memory_space<vmem>>, vector<128x128xf32>
      tpu.vector_store %arg6[%c0_11, %c0_12], %12 {strides = array<i32>} : memref<128x128xf32, #tpu.memory_space<vmem>>, vector<128x128xf32>,
    } else {
    }
    %c0 = arith.constant 0 : index
    %c0_1 = arith.constant 0 : index
    %3 = vector.load %arg6[%c0, %c0_1] : memref<128x128xf32, #tpu.memory_space<vmem>>, vector<128x128xf32>
    %c0_2 = arith.constant 0 : index
    %c0_3 = arith.constant 0 : index
    %4 = vector.load %arg3[%c0_2, %c0_3] : memref<128x256xbf16, #tpu.memory_space<vmem>>, vector<128x256xbf16>
    %c0_4 = arith.constant 0 : index
    %c0_5 = arith.constant 0 : index
    %5 = vector.load %arg4[%c0_4, %c0_5] : memref<256x128xbf16, #tpu.memory_space<vmem>>, vector<256x128xbf16>
    %cst = arith.constant dense<0.000000e+00> : vector<128x128xf32>
    %6 = tpu.matmul %4, %5, %cst {dimension_numbers = #tpu.dot_dimension_numbers<[1], [0], [0], [1], [0, 0, 1, 1], [], []>} : vector<128x256xbf16>, vector<256x128xbf16>, vector<128x128xf32> -> vector<128x128xf32>
    %7 = arith.addf %3, %6 : vector<128x128xf32>
    %c0_6 = arith.constant 0 : index
    %c0_7 = arith.constant 0 : index
    %8 = vector.load %arg6[%c0_6, %c0_7] : memref<128x128xf32, #tpu.memory_space<vmem>>, vector<128x128xf32>
    tpu.vector_store %arg6[%c0_6, %c0_7], %7 {strides = array<i32>} : memref<128x128xf32, #tpu.memory_space<vmem>>, vector<128x128xf32>,
    %c0_i32_8 = arith.constant 0 : i32
    %9 = arith.cmpi eq, %arg2, %c0_i32_8 : i32
    %10 = arith.extui %9 : i1 to i32
    %c0_i32_9 = arith.constant 0 : i32
    %11 = arith.cmpi ne, %10, %c0_i32_9 : i32
    scf.if %11 {
      %c0_10 = arith.constant 0 : index
      %c0_11 = arith.constant 0 : index
      %12 = vector.load %arg6[%c0_10, %c0_11] : memref<128x128xf32, #tpu.memory_space<vmem>>, vector<128x128xf32>
      %c0_12 = arith.constant 0 : index
      %c0_13 = arith.constant 0 : index
      %13 = vector.load %arg5[%c0_12, %c0_13] : memref<1x128xf32, #tpu.memory_space<vmem>>, vector<1x128xf32>
      %14 = vector.broadcast %13 : vector<1x128xf32> to vector<128x128xf32>
      %15 = arith.addf %12, %14 : vector<128x128xf32>
      %cst_14 = arith.constant 0.000000e+00 : f32
      %16 = vector.broadcast %cst_14 : f32 to vector<128x128xf32>
      %17 = arith.maximumf %15, %16 : vector<128x128xf32>
      %c0_15 = arith.constant 0 : index
      %c0_16 = arith.constant 0 : index
      %18 = vector.load %arg6[%c0_15, %c0_16] : memref<128x128xf32, #tpu.memory_space<vmem>>, vector<128x128xf32>
      tpu.vector_store %arg6[%c0_15, %c0_16], %17 {strides = array<i32>} : memref<128x128xf32, #tpu.memory_space<vmem>>, vector<128x128xf32>,
    } else {
    }
    return
  }
  func.func @transform_0(%arg0: i32, %arg1: i32, %arg2: i32) -> (i32, i32) {
    %c0_i32 = arith.constant 0 : i32
    return %arg0, %arg2 : i32, i32
  }
  func.func @transform_1(%arg0: i32, %arg1: i32, %arg2: i32) -> (i32, i32) {
    %c0_i32 = arith.constant 0 : i32
    return %arg2, %arg1 : i32, i32
  }
  func.func @transform_2(%arg0: i32, %arg1: i32, %arg2: i32) -> (i32, i32) {
    %c0_i32 = arith.constant 0 : i32
    %c0_i32_0 = arith.constant 0 : i32
    return %c0_i32, %arg1 : i32, i32
  }
  func.func @transform_3(%arg0: i32, %arg1: i32, %arg2: i32) -> (i32, i32) {
    %c0_i32 = arith.constant 0 : i32
    return %arg0, %arg1 : i32, i32
  }
}

</mosaic_0001>

<llo_original>
// kernel: tpu_custom_call.1
$region0: #{tpu_custom_call.1}
  #allocation0 [shape = 'u32[]', space=smem, size = 0x4, offset = 0x4, fixed_abs, tag = 'smem constant byte address 0x4 - core index']
  #allocation1 [shape = 'u32[144,128]{1,0:T(1,128)}', space=vmem, size = 0x12000, scoped, tag = 'internal scratch']
  %s0 = inlined_call_operand.hbm [shape: bf16[128,256], index: 0, kind: input, shape index: {}]
  %s1 = inlined_call_operand.hbm [shape: bf16[256,128], index: 1, kind: input, shape index: {}]
  %s2 = inlined_call_operand.vmem [shape: f32[1,128], index: 2, kind: input, shape index: {}]
  %s3 = inlined_call_operand.hbm [shape: f32[128,128], index: 3, kind: output, shape index: {}]
  %s4 = sld [smem:[#allocation0]]
  $region38: #{tpu_custom_call.1} parent=0
    _
  %s6 = ssub.s32 1, %s4
  %s7 = scalar_select 0, %s6, %s4
  $region1: #{tpu_custom_call.1} parent=0
    #allocation2 [shape = 'u8[65536]{0}', space=vmem, size = 0x10000, scoped, tag = 'input window, operand 0, single buffered']
    #allocation3 [shape = 's32[1]{0}', space=sflag, size = 0x4, scoped, tag = 'scoped memory for tpu_custom_call.1']
    #allocation4 [shape = 's32[1]{0}', space=sflag, size = 0x4, scoped, tag = 'scoped memory for tpu_custom_call.1']
    #allocation5 [shape = 'u8[65536]{0}', space=vmem, size = 0x10000, scoped, tag = 'input window, operand 1, single buffered']
    #allocation6 [shape = 's32[1]{0}', space=sflag, size = 0x4, scoped, tag = 'scoped memory for tpu_custom_call.1']
    #allocation7 [shape = 'u8[65536]{0}', space=vmem, size = 0x10000, scoped, tag = 'output window, operand 0, single buffered']
    %8 = vsyncpa [#allocation3], 0
    %9 = vsyncpa [#allocation6], 0
    %10 = vsyncpa [#allocation4], 0
    // Predicated region
    $region2: #{tpu_custom_call.1} parent=1 // pred_check
      _
    $region3: #{tpu_custom_call.1} parent=1 // pred_check_branch
      %12 = sbr.rel (0) target = $region5
    $region4: #{tpu_custom_call.1} parent=1 // pred_region
      %s14 = ssub.s32 2048, 2048
      %15 = vsyncadd [#allocation3], %s14
      %s16 = sshll.u32 [#allocation2], 4
      %s17 = int_to_ptr.vmem [resolvable:$true] %s16
      %22 = dma.hbm_to_vmem [thread:$0]  %s0, 2048, %s17, [#allocation3], 128, 128, 8
    $region5: #{tpu_custom_call.1} parent=1 // pred_fallthru
      _
    // Predicated region
    $region6: #{tpu_custom_call.1} parent=1 // pred_check
      _
    $region7: #{tpu_custom_call.1} parent=1 // pred_check_branch
      %24 = sbr.rel (0) target = $region9
    $region8: #{tpu_custom_call.1} parent=1 // pred_region
      %s26 = ssub.s32 2048, 2048
      %27 = vsyncadd [#allocation6], %s26
      %s28 = sshll.u32 [#allocation5], 4
      %s29 = int_to_ptr.vmem [resolvable:$true] %s28
      %34 = dma.hbm_to_vmem [thread:$0]  %s1, 2048, %s29, [#allocation6], 64, 64, 4
    $region9: #{tpu_custom_call.1} parent=1 // pred_fallthru
      _
    // Predicated region
    $region10: #{tpu_custom_call.1} parent=1 // pred_check
      _
    $region11: #{tpu_custom_call.1} parent=1 // pred_check_branch
      %36 = sbr.rel (0) target = $region13
    $region12: #{tpu_custom_call.1} parent=1 // pred_region
      _
    $region13: #{tpu_custom_call.1} parent=1 // pred_fallthru
      _
    // Predicated region
    $region14: #{tpu_custom_call.1} parent=1 // pred_check
      _
    $region15: #{tpu_custom_call.1} parent=1 // pred_check_branch
      %38 = sbr.rel (0) target = $region17
    $region16: #{tpu_custom_call.1} parent=1 // pred_region
      %39 = dma.done [#allocation3], 2048
    $region17: #{tpu_custom_call.1} parent=1 // pred_fallthru
      _
    // Predicated region
    $region18: #{tpu_custom_call.1} parent=1 // pred_check
      _
    $region19: #{tpu_custom_call.1} parent=1 // pred_check_branch
      %41 = sbr.rel (0) target = $region21
    $region20: #{tpu_custom_call.1} parent=1 // pred_region
      %42 = dma.done [#allocation6], 2048
    $region21: #{tpu_custom_call.1} parent=1 // pred_fallthru
      _
    %p44 = scmp.eq.s32.totalorder 0, 0
    // Predicated region
    $region22: #{tpu_custom_call.1} parent=1 // pred_check
      %p45 = pneg %p44
    $region23: #{tpu_custom_call.1} parent=1 // pred_check_branch
      %47 = sbr.rel (%p45) target = $region25
    $region24: #{tpu_custom_call.1} parent=1 // pred_region
      %48 = vst [vmem:[#allocation7] sm:$0xff] 0.0
      %49 = vst [vmem:[#allocation7 + $0x8] sm:$0xff] 0.0
      %50 = vst [vmem:[#allocation7 + $0x10] sm:$0xff] 0.0
      %51 = vst [vmem:[#allocation7 + $0x18] sm:$0xff] 0.0
      %52 = vst [vmem:[#allocation7 + $0x20] sm:$0xff] 0.0
      %53 = vst [vmem:[#allocation7 + $0x28] sm:$0xff] 0.0
      %54 = vst [vmem:[#allocation7 + $0x30] sm:$0xff] 0.0
      %55 = vst [vmem:[#allocation7 + $0x38] sm:$0xff] 0.0
      %56 = vst [vmem:[#allocation7 + $0x40] sm:$0xff] 0.0
      %57 = vst [vmem:[#allocation7 + $0x48] sm:$0xff] 0.0
      %58 = vst [vmem:[#allocation7 + $0x50] sm:$0xff] 0.0
      %59 = vst [vmem:[#allocation7 + $0x58] sm:$0xff] 0.0
      %60 = vst [vmem:[#allocation7 + $0x60] sm:$0xff] 0.0
      %61 = vst [vmem:[#allocation7 + $0x68] sm:$0xff] 0.0
      %62 = vst [vmem:[#allocation7 + $0x70] sm:$0xff] 0.0
      %63 = vst [vmem:[#allocation7 + $0x78] sm:$0xff] 0.0
    $region25: #{tpu_custom_call.1} parent=1 // pred_fallthru
      _
    %v64 = vld [vmem:[#allocation7] sm:$0xff]
    %v65 = vld [vmem:[#allocation7 + $0x8] sm:$0xff]
    %v66 = vld [vmem:[#allocation7 + $0x10] sm:$0xff]
    %v67 = vld [vmem:[#allocation7 + $0x18] sm:$0xff]
    %v68 = vld [vmem:[#allocation7 + $0x20] sm:$0xff]
    %v69 = vld [vmem:[#allocation7 + $0x28] sm:$0xff]
    %v70 = vld [vmem:[#allocation7 + $0x30] sm:$0xff]
    %v71 = vld [vmem:[#allocation7 + $0x38] sm:$0xff]
    %v72 = vld [vmem:[#allocation7 + $0x40] sm:$0xff]
    %v73 = vld [vmem:[#allocation7 + $0x48] sm:$0xff]
    %v74 = vld [vmem:[#allocation7 + $0x50] sm:$0xff]
    %v75 = vld [vmem:[#allocation7 + $0x58] sm:$0xff]
    %v76 = vld [vmem:[#allocation7 + $0x60] sm:$0xff]
    %v77 = vld [vmem:[#allocation7 + $0x68] sm:$0xff]
    %v78 = vld [vmem:[#allocation7 + $0x70] sm:$0xff]
    %v79 = vld [vmem:[#allocation7 + $0x78] sm:$0xff]
    %v80 = vld [vmem:[#allocation2] sm:$0xff]
    %v81 = vld [vmem:[#allocation2 + $0x8] sm:$0xff]
    %v82 = vld [vmem:[#allocation2 + $0x10] sm:$0xff]
    %v83 = vld [vmem:[#allocation2 + $0x18] sm:$0xff]
    %v84 = vld [vmem:[#allocation2 + $0x20] sm:$0xff]
    %v85 = vld [vmem:[#allocation2 + $0x28] sm:$0xff]
    %v86 = vld [vmem:[#allocation2 + $0x30] sm:$0xff]
    %v87 = vld [vmem:[#allocation2 + $0x38] sm:$0xff]
    %v88 = vld [vmem:[#allocation2 + $0x40] sm:$0xff]
    %v89 = vld [vmem:[#allocation2 + $0x48] sm:$0xff]
    %v90 = vld [vmem:[#allocation2 + $0x50] sm:$0xff]
    %v91 = vld [vmem:[#allocation2 + $0x58] sm:$0xff]
    %v92 = vld [vmem:[#allocation2 + $0x60] sm:$0xff]
    %v93 = vld [vmem:[#allocation2 + $0x68] sm:$0xff]
    %v94 = vld [vmem:[#allocation2 + $0x70] sm:$0xff]
    %v95 = vld [vmem:[#allocation2 + $0x78] sm:$0xff]
    %v96 = vld [vmem:[#allocation5] sm:$0xf]
    %v97 = vld [vmem:[#allocation5 + $0x4] sm:$0xf]
    %v98 = vld [vmem:[#allocation5 + $0x8] sm:$0xf]
    %v99 = vld [vmem:[#allocation5 + $0xc] sm:$0xf]
    %v100 = vld [vmem:[#allocation5 + $0x10] sm:$0xf]
    %v101 = vld [vmem:[#allocation5 + $0x14] sm:$0xf]
    %v102 = vld [vmem:[#allocation5 + $0x18] sm:$0xf]
    %v103 = vld [vmem:[#allocation5 + $0x1c] sm:$0xf]
    %v104 = vld [vmem:[#allocation5 + $0x20] sm:$0xf]
    %v105 = vld [vmem:[#allocation5 + $0x24] sm:$0xf]
    %v106 = vld [vmem:[#allocation5 + $0x28] sm:$0xf]
    %v107 = vld [vmem:[#allocation5 + $0x2c] sm:$0xf]
    %v108 = vld [vmem:[#allocation5 + $0x30] sm:$0xf]
    %v109 = vld [vmem:[#allocation5 + $0x34] sm:$0xf]
    %v110 = vld [vmem:[#allocation5 + $0x38] sm:$0xf]
    %v111 = vld [vmem:[#allocation5 + $0x3c] sm:$0xf]
    %v112 = vld [vmem:[#allocation5 + $0x40] sm:$0xf]
    %v113 = vld [vmem:[#allocation5 + $0x44] sm:$0xf]
    %v114 = vld [vmem:[#allocation5 + $0x48] sm:$0xf]
    %v115 = vld [vmem:[#allocation5 + $0x4c] sm:$0xf]
    %v116 = vld [vmem:[#allocation5 + $0x50] sm:$0xf]
    %v117 = vld [vmem:[#allocation5 + $0x54] sm:$0xf]
    %v118 = vld [vmem:[#allocation5 + $0x58] sm:$0xf]
    %v119 = vld [vmem:[#allocation5 + $0x5c] sm:$0xf]
    %v120 = vld [vmem:[#allocation5 + $0x60] sm:$0xf]
    %v121 = vld [vmem:[#allocation5 + $0x64] sm:$0xf]
    %v122 = vld [vmem:[#allocation5 + $0x68] sm:$0xf]
    %v123 = vld [vmem:[#allocation5 + $0x6c] sm:$0xf]
    %v124 = vld [vmem:[#allocation5 + $0x70] sm:$0xf]
    %v125 = vld [vmem:[#allocation5 + $0x74] sm:$0xf]
    %v126 = vld [vmem:[#allocation5 + $0x78] sm:$0xf]
    %v127 = vld [vmem:[#allocation5 + $0x7c] sm:$0xf]
    %v144 = vunpack.c.l.b16 %v80
    %v145 = vunpack.c.h.b16 %v80
    %v146 = vunpack.c.l.b16 %v81
    %v147 = vunpack.c.h.b16 %v81
    %v148 = vunpack.c.l.b16 %v82
    %v149 = vunpack.c.h.b16 %v82
    %v150 = vunpack.c.l.b16 %v83
    %v151 = vunpack.c.h.b16 %v83
    %v152 = vunpack.c.l.b16 %v84
    %v153 = vunpack.c.h.b16 %v84
    %v154 = vunpack.c.l.b16 %v85
    %v155 = vunpack.c.h.b16 %v85
    %v156 = vunpack.c.l.b16 %v86
    %v157 = vunpack.c.h.b16 %v86
    %v158 = vunpack.c.l.b16 %v87
    %v159 = vunpack.c.h.b16 %v87
    %v160 = vunpack.c.l.b16 %v88
    %v161 = vunpack.c.h.b16 %v88
    %v162 = vunpack.c.l.b16 %v89
    %v163 = vunpack.c.h.b16 %v89
    %v164 = vunpack.c.l.b16 %v90
    %v165 = vunpack.c.h.b16 %v90
    %v166 = vunpack.c.l.b16 %v91
    %v167 = vunpack.c.h.b16 %v91
    %v168 = vunpack.c.l.b16 %v92
    %v169 = vunpack.c.h.b16 %v92
    %v170 = vunpack.c.l.b16 %v93
    %v171 = vunpack.c.h.b16 %v93
    %v172 = vunpack.c.l.b16 %v94
    %v173 = vunpack.c.h.b16 %v94
    %v174 = vunpack.c.l.b16 %v95
    %v175 = vunpack.c.h.b16 %v95
    %v176 = vpack.c.b16 %v146, %v144
    %v177 = vpack.c.b16 %v147, %v145
    %v178 = vpack.c.b16 %v150, %v148
    %v179 = vpack.c.b16 %v151, %v149
    %v180 = vpack.c.b16 %v154, %v152
    %v181 = vpack.c.b16 %v155, %v153
    %v182 = vpack.c.b16 %v158, %v156
    %v183 = vpack.c.b16 %v159, %v157
    %v184 = vpack.c.b16 %v162, %v160
    %v185 = vpack.c.b16 %v163, %v161
    %v186 = vpack.c.b16 %v166, %v164
    %v187 = vpack.c.b16 %v167, %v165
    %v188 = vpack.c.b16 %v170, %v168
    %v189 = vpack.c.b16 %v171, %v169
    %v190 = vpack.c.b16 %v174, %v172
    %v191 = vpack.c.b16 %v175, %v173
    %v240 = vunpack.c.l.b16 %v96
    %v241 = vunpack.c.l.b16 %v97
    %v242 = vunpack.c.l.b16 %v98
    %v243 = vunpack.c.l.b16 %v99
    %v244 = vunpack.c.l.b16 %v100
    %v245 = vunpack.c.l.b16 %v101
    %v246 = vunpack.c.l.b16 %v102
    %v247 = vunpack.c.l.b16 %v103
    %v248 = vunpack.c.l.b16 %v104
    %v249 = vunpack.c.l.b16 %v105
    %v250 = vunpack.c.l.b16 %v106
    %v251 = vunpack.c.l.b16 %v107
    %v252 = vunpack.c.l.b16 %v108
    %v253 = vunpack.c.l.b16 %v109
    %v254 = vunpack.c.l.b16 %v110
    %v255 = vunpack.c.l.b16 %v111
    %v256 = vunpack.c.l.b16 %v112
    %v257 = vunpack.c.l.b16 %v113
    %v258 = vunpack.c.l.b16 %v114
    %v259 = vunpack.c.l.b16 %v115
    %v260 = vunpack.c.l.b16 %v116
    %v261 = vunpack.c.l.b16 %v117
    %v262 = vunpack.c.l.b16 %v118
    %v263 = vunpack.c.l.b16 %v119
    %v264 = vunpack.c.l.b16 %v120
    %v265 = vunpack.c.l.b16 %v121
    %v266 = vunpack.c.l.b16 %v122
    %v267 = vunpack.c.l.b16 %v123
    %v268 = vunpack.c.l.b16 %v124
    %v269 = vunpack.c.l.b16 %v125
    %v270 = vunpack.c.l.b16 %v126
    %v271 = vunpack.c.l.b16 %v127
    %v272 = vpack.c.b16 %v241, %v240
    %v273 = vpack.c.b16 %v243, %v242
    %v274 = vpack.c.b16 %v245, %v244
    %v275 = vpack.c.b16 %v247, %v246
    %v276 = vpack.c.b16 %v249, %v248
    %v277 = vpack.c.b16 %v251, %v250
    %v278 = vpack.c.b16 %v253, %v252
    %v279 = vpack.c.b16 %v255, %v254
    %v280 = vpack.c.b16 %v257, %v256
    %v281 = vpack.c.b16 %v259, %v258
    %v282 = vpack.c.b16 %v261, %v260
    %v283 = vpack.c.b16 %v263, %v262
    %v284 = vpack.c.b16 %v265, %v264
    %v285 = vpack.c.b16 %v267, %v266
    %v286 = vpack.c.b16 %v269, %v268
    %v287 = vpack.c.b16 %v271, %v270
    %304 = vmatprep.subr.bf16.mxu0 0
    %305 = vmatpush1.bf16.msra.mxu0 %v272
    %306 = vmatprep.subr.bf16.mxu0 0
    %307 = vmatpush1.bf16.msra.mxu0 %v273
    %308 = vmatprep.subr.bf16.mxu0 0
    %309 = vmatpush1.bf16.msra.mxu0 %v274
    %310 = vmatprep.subr.bf16.mxu0 0
    %311 = vmatpush1.bf16.msra.mxu0 %v275
    %312 = vmatprep.subr.bf16.mxu0 0
    %313 = vmatpush1.bf16.msra.mxu0 %v276
    %314 = vmatprep.subr.bf16.mxu0 0
    %315 = vmatpush1.bf16.msra.mxu0 %v277
    %316 = vmatprep.subr.bf16.mxu0 0
    %317 = vmatpush1.bf16.msra.mxu0 %v278
    %318 = vmatprep.subr.bf16.mxu0 0
    %319 = vmatpush1.bf16.msra.mxu0 %v279
    %320 = vmatprep.subr.bf16.mxu0 0
    %321 = vmatpush1.bf16.msra.mxu0 %v280
    %322 = vmatprep.subr.bf16.mxu0 0
    %323 = vmatpush1.bf16.msra.mxu0 %v281
    %324 = vmatprep.subr.bf16.mxu0 0
    %325 = vmatpush1.bf16.msra.mxu0 %v282
    %326 = vmatprep.subr.bf16.mxu0 0
    %327 = vmatpush1.bf16.msra.mxu0 %v283
    %328 = vmatprep.subr.bf16.mxu0 0
    %329 = vmatpush1.bf16.msra.mxu0 %v284
    %330 = vmatprep.subr.bf16.mxu0 0
    %331 = vmatpush1.bf16.msra.mxu0 %v285
    %332 = vmatprep.subr.bf16.mxu0 0
    %333 = vmatpush1.bf16.msra.mxu0 %v286
    %334 = vmatprep.subr.bf16.mxu0 0
    %335 = vmatpush1.bf16.msra.mxu0 %v287
    %336 = vmatprep.mubr.bf16.mxu0 %v177
    %337 = vmatmul.mubr.bf16.gmra.mrb[0].mxu0 %v176
    %v338 = vpop.f32.mrb[0].mxu0
    %v339 = vadd.f32 0.0, %v338
    %v340 = vpop.f32.mrb[0].mxu0
    %v341 = vpop.f32.mrb[0].mxu0
    %v342 = vadd.f32 0.0, %v341
    %v343 = vpop.f32.mrb[0].mxu0
    %344 = vmatprep.mubr.bf16.mxu0 %v179
    %345 = vmatmul.mubr.bf16.gmra.mrb[0].mxu0 %v178
    %v346 = vpop.f32.mrb[0].mxu0
    %v347 = vadd.f32 0.0, %v346
    %v348 = vpop.f32.mrb[0].mxu0
    %v349 = vpop.f32.mrb[0].mxu0
    %v350 = vadd.f32 0.0, %v349
    %v351 = vpop.f32.mrb[0].mxu0
    %352 = vmatprep.mubr.bf16.mxu0 %v181
    %353 = vmatmul.mubr.bf16.gmra.mrb[0].mxu0 %v180
    %v354 = vpop.f32.mrb[0].mxu0
    %v355 = vadd.f32 0.0, %v354
    %v356 = vpop.f32.mrb[0].mxu0
    %v357 = vpop.f32.mrb[0].mxu0
    %v358 = vadd.f32 0.0, %v357
    %v359 = vpop.f32.mrb[0].mxu0
    %360 = vmatprep.mubr.bf16.mxu0 %v183
    %361 = vmatmul.mubr.bf16.gmra.mrb[0].mxu0 %v182
    %v362 = vpop.f32.mrb[0].mxu0
    %v363 = vadd.f32 0.0, %v362
    %v364 = vpop.f32.mrb[0].mxu0
    %v365 = vpop.f32.mrb[0].mxu0
    %v366 = vadd.f32 0.0, %v365
    %v367 = vpop.f32.mrb[0].mxu0
    %368 = vmatprep.mubr.bf16.mxu0 %v185
    %369 = vmatmul.mubr.bf16.gmra.mrb[0].mxu0 %v184
    %v370 = vpop.f32.mrb[0].mxu0
    %v371 = vadd.f32 0.0, %v370
    %v372 = vpop.f32.mrb[0].mxu0
    %v373 = vpop.f32.mrb[0].mxu0
    %v374 = vadd.f32 0.0, %v373
    %v375 = vpop.f32.mrb[0].mxu0
    %376 = vmatprep.mubr.bf16.mxu0 %v187
    %377 = vmatmul.mubr.bf16.gmra.mrb[0].mxu0 %v186
    %v378 = vpop.f32.mrb[0].mxu0
    %v379 = vadd.f32 0.0, %v378
    %v380 = vpop.f32.mrb[0].mxu0
    %v381 = vpop.f32.mrb[0].mxu0
    %v382 = vadd.f32 0.0, %v381
    %v383 = vpop.f32.mrb[0].mxu0
    %384 = vmatprep.mubr.bf16.mxu0 %v189
    %385 = vmatmul.mubr.bf16.gmra.mrb[0].mxu0 %v188
    %v386 = vpop.f32.mrb[0].mxu0
    %v387 = vadd.f32 0.0, %v386
    %v388 = vpop.f32.mrb[0].mxu0
    %v389 = vpop.f32.mrb[0].mxu0
    %v390 = vadd.f32 0.0, %v389
    %v391 = vpop.f32.mrb[0].mxu0
    %392 = vmatprep.mubr.bf16.mxu0 %v191
    %393 = vmatmul.mubr.bf16.gmra.mrb[0].mxu0 %v190
    %v394 = vpop.f32.mrb[0].mxu0
    %v395 = vadd.f32 0.0, %v394
    %v396 = vpop.f32.mrb[0].mxu0
    %v397 = vpop.f32.mrb[0].mxu0
    %v398 = vadd.f32 0.0, %v397
    %v399 = vpop.f32.mrb[0].mxu0
    %400 = vdwg.mxu0
    %v401 = vadd.f32 %v64, %v339
    %v402 = vadd.f32 %v65, %v342
    %v403 = vadd.f32 %v66, %v347
    %v404 = vadd.f32 %v67, %v350
    %v405 = vadd.f32 %v68, %v355
    %v406 = vadd.f32 %v69, %v358
    %v407 = vadd.f32 %v70, %v363
    %v408 = vadd.f32 %v71, %v366
    %v409 = vadd.f32 %v72, %v371
    %v410 = vadd.f32 %v73, %v374
    %v411 = vadd.f32 %v74, %v379
    %v412 = vadd.f32 %v75, %v382
    %v413 = vadd.f32 %v76, %v387
    %v414 = vadd.f32 %v77, %v390
    %v415 = vadd.f32 %v78, %v395
    %v416 = vadd.f32 %v79, %v398
    %417 = vst [vmem:[#allocation7] sm:$0xff] %v401
    %418 = vst [vmem:[#allocation7 + $0x8] sm:$0xff] %v402
    %419 = vst [vmem:[#allocation7 + $0x10] sm:$0xff] %v403
    %420 = vst [vmem:[#allocation7 + $0x18] sm:$0xff] %v404
    %421 = vst [vmem:[#allocation7 + $0x20] sm:$0xff] %v405
    %422 = vst [vmem:[#allocation7 + $0x28] sm:$0xff] %v406
    %423 = vst [vmem:[#allocation7 + $0x30] sm:$0xff] %v407
    %424 = vst [vmem:[#allocation7 + $0x38] sm:$0xff] %v408
    %425 = vst [vmem:[#allocation7 + $0x40] sm:$0xff] %v409
    %426 = vst [vmem:[#allocation7 + $0x48] sm:$0xff] %v410
    %427 = vst [vmem:[#allocation7 + $0x50] sm:$0xff] %v411
    %428 = vst [vmem:[#allocation7 + $0x58] sm:$0xff] %v412
    %429 = vst [vmem:[#allocation7 + $0x60] sm:$0xff] %v413
    %430 = vst [vmem:[#allocation7 + $0x68] sm:$0xff] %v414
    %431 = vst [vmem:[#allocation7 + $0x70] sm:$0xff] %v415
    %432 = vst [vmem:[#allocation7 + $0x78] sm:$0xff] %v416
    // Predicated region
    $region26: #{tpu_custom_call.1} parent=1 // pred_check
      %p433 = pneg %p44
    $region27: #{tpu_custom_call.1} parent=1 // pred_check_branch
      %435 = sbr.rel (%p433) target = $region29
    $region28: #{tpu_custom_call.1} parent=1 // pred_region
      %v436 = vld [vmem:[#allocation7] sm:$0xff]
      %v437 = vld [vmem:[#allocation7 + $0x8] sm:$0xff]
      %v438 = vld [vmem:[#allocation7 + $0x10] sm:$0xff]
      %v439 = vld [vmem:[#allocation7 + $0x18] sm:$0xff]
      %v440 = vld [vmem:[#allocation7 + $0x20] sm:$0xff]
      %v441 = vld [vmem:[#allocation7 + $0x28] sm:$0xff]
      %v442 = vld [vmem:[#allocation7 + $0x30] sm:$0xff]
      %v443 = vld [vmem:[#allocation7 + $0x38] sm:$0xff]
      %v444 = vld [vmem:[#allocation7 + $0x40] sm:$0xff]
      %v445 = vld [vmem:[#allocation7 + $0x48] sm:$0xff]
      %v446 = vld [vmem:[#allocation7 + $0x50] sm:$0xff]
      %v447 = vld [vmem:[#allocation7 + $0x58] sm:$0xff]
      %v448 = vld [vmem:[#allocation7 + $0x60] sm:$0xff]
      %v449 = vld [vmem:[#allocation7 + $0x68] sm:$0xff]
      %v450 = vld [vmem:[#allocation7 + $0x70] sm:$0xff]
      %v451 = vld [vmem:[#allocation7 + $0x78] sm:$0xff]
      %v452 = vld [vmem:[%s2] sm:$0x1]
      %v454 = vlaneseq
      %v455 = vshrl.u32 %v454, 7
      %v456 = vsub.s32 0, %v455
      %v457 = vrot.slane %v452, %v456
      %v459 = vadd.f32 %v436, %v457
      %v460 = vadd.f32 %v437, %v457
      %v461 = vadd.f32 %v438, %v457
      %v462 = vadd.f32 %v439, %v457
      %v463 = vadd.f32 %v440, %v457
      %v464 = vadd.f32 %v441, %v457
      %v465 = vadd.f32 %v442, %v457
      %v466 = vadd.f32 %v443, %v457
      %v467 = vadd.f32 %v444, %v457
      %v468 = vadd.f32 %v445, %v457
      %v469 = vadd.f32 %v446, %v457
      %v470 = vadd.f32 %v447, %v457
      %v471 = vadd.f32 %v448, %v457
      %v472 = vadd.f32 %v449, %v457
      %v473 = vadd.f32 %v450, %v457
      %v474 = vadd.f32 %v451, %v457
      %v475 = vmax.f32 %v459, 0.0
      %v476 = vmax.f32 %v460, 0.0
      %v477 = vmax.f32 %v461, 0.0
      %v478 = vmax.f32 %v462, 0.0
      %v479 = vmax.f32 %v463, 0.0
      %v480 = vmax.f32 %v464, 0.0
      %v481 = vmax.f32 %v465, 0.0
      %v482 = vmax.f32 %v466, 0.0
      %v483 = vmax.f32 %v467, 0.0
      %v484 = vmax.f32 %v468, 0.0
      %v485 = vmax.f32 %v469, 0.0
      %v486 = vmax.f32 %v470, 0.0
      %v487 = vmax.f32 %v471, 0.0
      %v488 = vmax.f32 %v472, 0.0
      %v489 = vmax.f32 %v473, 0.0
      %v490 = vmax.f32 %v474, 0.0
      %491 = vst [vmem:[#allocation7] sm:$0xff] %v475
      %492 = vst [vmem:[#allocation7 + $0x8] sm:$0xff] %v476
      %493 = vst [vmem:[#allocation7 + $0x10] sm:$0xff] %v477
      %494 = vst [vmem:[#allocation7 + $0x18] sm:$0xff] %v478
      %495 = vst [vmem:[#allocation7 + $0x20] sm:$0xff] %v479
      %496 = vst [vmem:[#allocation7 + $0x28] sm:$0xff] %v480
      %497 = vst [vmem:[#allocation7 + $0x30] sm:$0xff] %v481
      %498 = vst [vmem:[#allocation7 + $0x38] sm:$0xff] %v482
      %499 = vst [vmem:[#allocation7 + $0x40] sm:$0xff] %v483
      %500 = vst [vmem:[#allocation7 + $0x48] sm:$0xff] %v484
      %501 = vst [vmem:[#allocation7 + $0x50] sm:$0xff] %v485
      %502 = vst [vmem:[#allocation7 + $0x58] sm:$0xff] %v486
      %503 = vst [vmem:[#allocation7 + $0x60] sm:$0xff] %v487
      %504 = vst [vmem:[#allocation7 + $0x68] sm:$0xff] %v488
      %505 = vst [vmem:[#allocation7 + $0x70] sm:$0xff] %v489
      %506 = vst [vmem:[#allocation7 + $0x78] sm:$0xff] %v490
    $region29: #{tpu_custom_call.1} parent=1 // pred_fallthru
      _
    // Predicated region
    $region30: #{tpu_custom_call.1} parent=1 // pred_check
      _
    $region31: #{tpu_custom_call.1} parent=1 // pred_check_branch
      %508 = sbr.rel (0) target = $region33
    $region32: #{tpu_custom_call.1} parent=1 // pred_region
      %s510 = ssub.s32 2048, 2048
      %511 = vsyncadd [#allocation4], %s510
      %s512 = sshll.u32 [#allocation7], 4
      %s513 = int_to_ptr.vmem [resolvable:$true] %s512
      %518 = dma.vmem_to_hbm [thread:$0]  %s513, 2048, %s3, [#allocation4], 128, 128, 8
    $region33: #{tpu_custom_call.1} parent=1 // pred_fallthru
      _
    // Predicated region
    $region34: #{tpu_custom_call.1} parent=1 // pred_check
      _
    $region35: #{tpu_custom_call.1} parent=1 // pred_check_branch
      %520 = sbr.rel (0) target = $region37
    $region36: #{tpu_custom_call.1} parent=1 // pred_region
      %521 = dma.done [#allocation4], 2048
    $region37: #{tpu_custom_call.1} parent=1 // pred_fallthru
      _
    %522 = vsyncpa [#allocation3], 1
    %523 = vsyncpa [#allocation6], 1
    %524 = vsyncpa [#allocation4], 1

</llo_original>
